<compile_context>
chip_gen: v6e
topology: v6e:2x2x1
jax: 0.10.0
libtpu: 0.0.40
codegen_flags: <defaults>
</compile_context>

<pallas_src>
import functools

import numpy as np
import jax
import jax.numpy as jnp
from jax.experimental import pallas as pl
from jax.experimental.pallas import tpu as pltpu


def _bilinear_weight_matrix(out_size: int, in_size: int) -> np.ndarray:
    """Host-side (numpy) interpolation matrix W (out_size, in_size): out = W @ in.

    Matches PyTorch bilinear, align_corners=False: src = max(0, s*(dst+0.5)-0.5),
    2-tap lerp between floor(src) and floor(src)+1 (clamped to the last row).
    """
    scale = in_size / out_size
    dst = np.arange(out_size, dtype=np.float64)
    src = np.maximum(scale * (dst + 0.5) - 0.5, 0.0)
    i0 = np.clip(np.floor(src).astype(np.int64), 0, in_size - 1)
    i1 = np.clip(i0 + 1, 0, in_size - 1)
    w1 = (src - i0).astype(np.float32)
    w0 = (1.0 - w1).astype(np.float32)
    w = np.zeros((out_size, in_size), dtype=np.float32)
    rows = np.arange(out_size)
    np.add.at(w, (rows, i0), w0)   # when i0 == i1 (top edge) weights still sum to 1
    np.add.at(w, (rows, i1), w1)
    return w


def _resize_kernel(wyb_ref, x_ref, wxt_ref, o_ref):
    # wyb_ref: (C*Ho, C*H)  block-diagonal height interpolation weights (const)
    # x_ref  : (C*H,  W)    all channels stacked along rows
    # wxt_ref: (W,    Wo)   width interpolation weights, transposed (const)
    # o_ref  : (C*Ho, Wo)   un-padded output (masked store, tiny writeback)
    #
    # Two MXU calls total: width direction over all channels at once, then the
    # block-diagonal height matmul folds the per-channel loop into one dot.
    t = jnp.dot(x_ref[...], wxt_ref[...],
                preferred_element_type=jnp.float32)            # (C*H, Wo)
    o_ref[...] = jnp.dot(wyb_ref[...], t,
                         preferred_element_type=jnp.float32).astype(o_ref.dtype)


@functools.partial(jax.jit, static_argnames=("scale_factor",))
def scale_change(x: jnp.ndarray, scale_factor: float) -> jnp.ndarray:
    """x: (C, H, W) float32. Returns (C, int(H*s), int(W*s)) bilinear resize."""
    C, H, W = x.shape
    Ho = int(H * scale_factor)
    Wo = int(W * scale_factor)

    # Compile-time constants (numpy): no runtime weight-construction HLOs.
    wy = _bilinear_weight_matrix(Ho, H)                          # (Ho, H)
    wy_blk = np.kron(np.eye(C, dtype=np.float32), wy)            # (C*Ho, C*H)
    wxt = np.ascontiguousarray(_bilinear_weight_matrix(Wo, W).T)  # (W, Wo)

    x2d = x.reshape(C * H, W)  # free reshape for contiguous CHW

    out2d = pl.pallas_call(
        _resize_kernel,
        out_shape=jax.ShapeDtypeStruct((C * Ho, Wo), x.dtype),
        in_specs=[
            pl.BlockSpec(memory_space=pltpu.MemorySpace.VMEM),  # wy_blk
            pl.BlockSpec(memory_space=pltpu.MemorySpace.VMEM),  # x (C*H, W)
            pl.BlockSpec(memory_space=pltpu.MemorySpace.VMEM),  # wxt
        ],
        out_specs=pl.BlockSpec(memory_space=pltpu.MemorySpace.VMEM),
    )(wy_blk, x2d, wxt)

    # Metadata-only reshape (row-major contiguous) under jit.
    return out2d.reshape(C, Ho, Wo)


if __name__ == "__main__":
    key = jax.random.PRNGKey(0)
    k_scale, k_x = jax.random.split(key)

    # Deterministic "random" scale in [0.8, 1.2) — drawn once, like random.uniform.
    scale_factor = float(jax.random.uniform(k_scale, (), minval=0.8, maxval=1.2))

    C, H, W = 4, 16, 16
    x = jax.random.normal(k_x, (C, H, W), dtype=jnp.float32)

    y = scale_change(x, scale_factor)
    jax.block_until_ready(y)

    # Sanity: compare against a pure-JAX separable bilinear reference.
    Ho, Wo = int(H * scale_factor), int(W * scale_factor)
    wy_ref = jnp.asarray(_bilinear_weight_matrix(Ho, H))
    wx_ref = jnp.asarray(_bilinear_weight_matrix(Wo, W))
    ref = jnp.einsum('oh,chw,pw->cop', wy_ref, x, wx_ref)
    assert y.shape == (C, Ho, Wo), (y.shape, (C, Ho, Wo))
    assert jnp.allclose(y, ref, atol=1e-5), "mismatch vs reference"

    print("KERNEL_OK")
</pallas_src>

<mosaic_0001>
module attributes {stable_mosaic.version = 11 : i64} {
  func.func @_resize_kernel(%arg0: memref<72x64xf32, #tpu.memory_space<vmem>>, %arg1: memref<64x16xf32, #tpu.memory_space<vmem>>, %arg2: memref<16x18xf32, #tpu.memory_space<vmem>>, %arg3: memref<72x18xf32, #tpu.memory_space<vmem>>) attributes {dimension_semantics = [], scalar_prefetch = 0 : i64, scratch_operands = 0 : i64, tpu.core_type = #tpu.core_type<tc>} {
    %c0 = arith.constant 0 : index
    %c0_0 = arith.constant 0 : index
    %0 = vector.load %arg1[%c0, %c0_0] : memref<64x16xf32, #tpu.memory_space<vmem>>, vector<64x16xf32>
    %c0_1 = arith.constant 0 : index
    %c0_2 = arith.constant 0 : index
    %1 = vector.load %arg2[%c0_1, %c0_2] : memref<16x18xf32, #tpu.memory_space<vmem>>, vector<16x18xf32>
    %cst = arith.constant dense<0.000000e+00> : vector<64x18xf32>
    %2 = tpu.matmul %0, %1, %cst {dimension_numbers = #tpu.dot_dimension_numbers<[1], [0], [0], [1], [0, 0, 1, 1], [], []>} : vector<64x16xf32>, vector<16x18xf32>, vector<64x18xf32> -> vector<64x18xf32>
    %c0_3 = arith.constant 0 : index
    %c0_4 = arith.constant 0 : index
    %3 = vector.load %arg0[%c0_3, %c0_4] : memref<72x64xf32, #tpu.memory_space<vmem>>, vector<72x64xf32>
    %cst_5 = arith.constant dense<0.000000e+00> : vector<72x18xf32>
    %4 = tpu.matmul %3, %2, %cst_5 {dimension_numbers = #tpu.dot_dimension_numbers<[1], [0], [0], [1], [0, 0, 1, 1], [], []>} : vector<72x64xf32>, vector<64x18xf32>, vector<72x18xf32> -> vector<72x18xf32>
    %c0_6 = arith.constant 0 : index
    %c0_7 = arith.constant 0 : index
    %5 = vector.load %arg3[%c0_6, %c0_7] : memref<72x18xf32, #tpu.memory_space<vmem>>, vector<72x18xf32>
    tpu.vector_store %arg3[%c0_6, %c0_7], %4 {strides = array<i32>} : memref<72x18xf32, #tpu.memory_space<vmem>>, vector<72x18xf32>,
    return
  }
}

</mosaic_0001>

<llo_original>
// kernel: scale_change.1
$region0: #{scale_change.1}
  #allocation0 [shape = 'u32[]', space=smem, size = 0x4, offset = 0x4, fixed_abs, tag = 'smem constant byte address 0x4 - core index']
  #allocation1 [shape = 'u32[144,128]{1,0:T(1,128)}', space=vmem, size = 0x12000, scoped, tag = 'internal scratch']
  %s0 = inlined_call_operand.hbm [shape: f32[72,64], index: 0, kind: input, shape index: {}]
  %s1 = inlined_call_operand.hbm [shape: f32[64,16], index: 1, kind: input, shape index: {}]
  %s2 = inlined_call_operand.hbm [shape: f32[16,18], index: 2, kind: input, shape index: {}]
  %s3 = inlined_call_operand.vmem [shape: f32[72,18], index: 3, kind: output, shape index: {}]
  %s4 = sld [smem:[#allocation0]]
  $region34: #{scale_change.1} parent=0
    _
  %s6 = ssub.s32 1, %s4
  %s7 = scalar_select 0, %s6, %s4
  $region1: #{scale_change.1} parent=0
    #allocation2 [shape = 'u8[36864]{0}', space=vmem, size = 0x9000, scoped, tag = 'input window, operand 0, single buffered']
    #allocation3 [shape = 's32[1]{0}', space=sflag, size = 0x4, scoped, tag = 'scoped memory for scale_change.1']
    #allocation4 [shape = 'u8[32768]{0}', space=vmem, size = 0x8000, scoped, tag = 'input window, operand 1, single buffered']
    #allocation5 [shape = 's32[1]{0}', space=sflag, size = 0x4, scoped, tag = 'scoped memory for scale_change.1']
    #allocation6 [shape = 'u8[8192]{0}', space=vmem, size = 0x2000, scoped, tag = 'input window, operand 2, single buffered']
    %8 = vsyncpa [#allocation3], 0
    %9 = vsyncpa [#allocation5], 0
    // Predicated region
    $region2: #{scale_change.1} parent=1 // pred_check
      _
    $region3: #{scale_change.1} parent=1 // pred_check_branch
      %11 = sbr.rel (0) target = $region5
    $region4: #{scale_change.1} parent=1 // pred_region
      %s13 = ssub.s32 1152, 1152
      %14 = vsyncadd [#allocation3], %s13
      %s15 = sshll.u32 [#allocation2], 4
      %s16 = int_to_ptr.vmem [resolvable:$true] %s15
      %21 = dma.hbm_to_vmem [thread:$0]  %s0, 1152, %s16, [#allocation3], 128, 128, 8
    $region5: #{scale_change.1} parent=1 // pred_fallthru
      _
    // Predicated region
    $region6: #{scale_change.1} parent=1 // pred_check
      _
    $region7: #{scale_change.1} parent=1 // pred_check_branch
      %23 = sbr.rel (0) target = $region9
    $region8: #{scale_change.1} parent=1 // pred_region
      %s25 = ssub.s32 1024, 1024
      %26 = vsyncadd [#allocation5], %s25
      %s27 = sshll.u32 [#allocation4], 4
      %s28 = int_to_ptr.vmem [resolvable:$true] %s27
      %33 = dma.hbm_to_vmem [thread:$0]  %s1, 1024, %s28, [#allocation5], 128, 128, 8
    $region9: #{scale_change.1} parent=1 // pred_fallthru
      _
    // Predicated region
    $region10: #{scale_change.1} parent=1 // pred_check
      _
    $region11: #{scale_change.1} parent=1 // pred_check_branch
      %35 = sbr.rel (0) target = $region13
    $region12: #{scale_change.1} parent=1 // pred_region
      %s37 = ssub.s32 256, 256
      %38 = vsyncadd [#allocation5], %s37
      %s39 = sshll.u32 [#allocation6], 4
      %s40 = int_to_ptr.vmem [resolvable:$true] %s39
      %45 = dma.hbm_to_vmem [thread:$0]  %s2, 256, %s40, [#allocation5], 128, 128, 8
    $region13: #{scale_change.1} parent=1 // pred_fallthru
      _
    // Predicated region
    $region14: #{scale_change.1} parent=1 // pred_check
      _
    $region15: #{scale_change.1} parent=1 // pred_check_branch
      %47 = sbr.rel (0) target = $region17
    $region16: #{scale_change.1} parent=1 // pred_region
      %48 = dma.done [#allocation3], 1152
    $region17: #{scale_change.1} parent=1 // pred_fallthru
      _
    // Predicated region
    $region18: #{scale_change.1} parent=1 // pred_check
      _
    $region19: #{scale_change.1} parent=1 // pred_check_branch
      %50 = sbr.rel (0) target = $region21
    $region20: #{scale_change.1} parent=1 // pred_region
      %51 = dma.done [#allocation5], 1024
    $region21: #{scale_change.1} parent=1 // pred_fallthru
      _
    // Predicated region
    $region22: #{scale_change.1} parent=1 // pred_check
      _
    $region23: #{scale_change.1} parent=1 // pred_check_branch
      %53 = sbr.rel (0) target = $region25
    $region24: #{scale_change.1} parent=1 // pred_region
      %54 = dma.done [#allocation5], 256
    $region25: #{scale_change.1} parent=1 // pred_fallthru
      _
    %v55 = vld [vmem:[#allocation4] sm:$0xff]
    %v56 = vld [vmem:[#allocation4 + $0x8] sm:$0xff]
    %v57 = vld [vmem:[#allocation4 + $0x10] sm:$0xff]
    %v58 = vld [vmem:[#allocation4 + $0x18] sm:$0xff]
    %v59 = vld [vmem:[#allocation4 + $0x20] sm:$0xff]
    %v60 = vld [vmem:[#allocation4 + $0x28] sm:$0xff]
    %v61 = vld [vmem:[#allocation4 + $0x30] sm:$0xff]
    %v62 = vld [vmem:[#allocation4 + $0x38] sm:$0xff]
    %v63 = vld [vmem:[#allocation6] sm:$0xff]
    %v64 = vld [vmem:[#allocation6 + $0x8] sm:$0xff]
    %vm65 = vcmask 130048
    %v67 = vsel %vm65, %v55, 0
    %v70 = vsel %vm65, %v56, 0
    %v73 = vsel %vm65, %v57, 0
    %v76 = vsel %vm65, %v58, 0
    %v79 = vsel %vm65, %v59, 0
    %v82 = vsel %vm65, %v60, 0
    %v85 = vsel %vm65, %v61, 0
    %v88 = vsel %vm65, %v62, 0
    %90 = vmatprep.subr.mxu0 0.0
    %91 = vmatpush1.msra.mxu0 0.0
    %92 = vmatprep.subr.mxu0 0.0
    %93 = vmatpush1.msra.mxu0 0.0
    %94 = vmatprep.subr.mxu0 0.0
    %95 = vmatpush1.msra.mxu0 0.0
    %96 = vmatprep.subr.mxu0 0.0
    %97 = vmatpush1.msra.mxu0 0.0
    %98 = vmatprep.subr.mxu0 0.0
    %99 = vmatpush1.msra.mxu0 0.0
    %100 = vmatprep.subr.mxu0 0.0
    %101 = vmatpush1.msra.mxu0 0.0
    %102 = vmatprep.subr.mxu0 0.0
    %103 = vmatpush1.msra.mxu0 0.0
    %104 = vmatprep.subr.mxu0 0.0
    %105 = vmatpush1.msra.mxu0 0.0
    %106 = vmatprep.subr.mxu0 0.0
    %107 = vmatpush1.msra.mxu0 0.0
    %108 = vmatprep.subr.mxu0 0.0
    %109 = vmatpush1.msra.mxu0 0.0
    %110 = vmatprep.subr.mxu0 0.0
    %111 = vmatpush1.msra.mxu0 0.0
    %112 = vmatprep.subr.mxu0 0.0
    %113 = vmatpush1.msra.mxu0 0.0
    %114 = vmatprep.subr.mxu0 0.0
    %115 = vmatpush1.msra.mxu0 0.0
    %116 = vmatprep.subr.mxu0 0.0
    %117 = vmatpush1.msra.mxu0 0.0
    %118 = vmatprep.subr.mxu0 0.0
    %119 = vmatpush1.msra.mxu0 %v64
    %120 = vmatprep.subr.mxu0 0.0
    %121 = vmatpush1.msra.mxu0 %v63
    %122 = vmatprep.subr.mxu0 0.0
    %123 = vmatpush2.msra.mxu0 0.0
    %124 = vmatprep.subr.mxu0 0.0
    %125 = vmatpush2.msra.mxu0 0.0
    %126 = vmatprep.subr.mxu0 0.0
    %127 = vmatpush2.msra.mxu0 0.0
    %128 = vmatprep.subr.mxu0 0.0
    %129 = vmatpush2.msra.mxu0 0.0
    %130 = vmatprep.subr.mxu0 0.0
    %131 = vmatpush2.msra.mxu0 0.0
    %132 = vmatprep.subr.mxu0 0.0
    %133 = vmatpush2.msra.mxu0 0.0
    %134 = vmatprep.subr.mxu0 0.0
    %135 = vmatpush2.msra.mxu0 0.0
    %136 = vmatprep.subr.mxu0 0.0
    %137 = vmatpush2.msra.mxu0 0.0
    %138 = vmatprep.subr.mxu0 0.0
    %139 = vmatpush2.msra.mxu0 0.0
    %140 = vmatprep.subr.mxu0 0.0
    %141 = vmatpush2.msra.mxu0 0.0
    %142 = vmatprep.subr.mxu0 0.0
    %143 = vmatpush2.msra.mxu0 0.0
    %144 = vmatprep.subr.mxu0 0.0
    %145 = vmatpush2.msra.mxu0 0.0
    %146 = vmatprep.subr.mxu0 0.0
    %147 = vmatpush2.msra.mxu0 0.0
    %148 = vmatprep.subr.mxu0 0.0
    %149 = vmatpush2.msra.mxu0 0.0
    %150 = vmatprep.subr.mxu0 0.0
    %151 = vmatpush2.msra.mxu0 0.0
    %152 = vmatprep.subr.mxu0 0.0
    %153 = vmatpush2.msra.mxu0 0.0
    %154 = vmatprep.mubr.f32.mxu0 0.0
    %155 = vmatmul.mubr.f32.gmra.mxu0 %v67
    %v156 = vpop.f32.mrf.mxu0
    %v157 = vadd.f32 0.0, %v156
    %v158 = vpop.f32.mrf.mxu0
    %159 = vmatprep.mubr.f32.mxu0 0.0
    %160 = vmatmul.mubr.f32.gmra.mxu0 %v70
    %v161 = vpop.f32.mrf.mxu0
    %v162 = vadd.f32 0.0, %v161
    %v163 = vpop.f32.mrf.mxu0
    %164 = vmatprep.mubr.f32.mxu0 0.0
    %165 = vmatmul.mubr.f32.gmra.mxu0 %v73
    %v166 = vpop.f32.mrf.mxu0
    %v167 = vadd.f32 0.0, %v166
    %v168 = vpop.f32.mrf.mxu0
    %169 = vmatprep.mubr.f32.mxu0 0.0
    %170 = vmatmul.mubr.f32.gmra.mxu0 %v76
    %v171 = vpop.f32.mrf.mxu0
    %v172 = vadd.f32 0.0, %v171
    %v173 = vpop.f32.mrf.mxu0
    %174 = vmatprep.mubr.f32.mxu0 0.0
    %175 = vmatmul.mubr.f32.gmra.mxu0 %v79
    %v176 = vpop.f32.mrf.mxu0
    %v177 = vadd.f32 0.0, %v176
    %v178 = vpop.f32.mrf.mxu0
    %179 = vmatprep.mubr.f32.mxu0 0.0
    %180 = vmatmul.mubr.f32.gmra.mxu0 %v82
    %v181 = vpop.f32.mrf.mxu0
    %v182 = vadd.f32 0.0, %v181
    %v183 = vpop.f32.mrf.mxu0
    %184 = vmatprep.mubr.f32.mxu0 0.0
    %185 = vmatmul.mubr.f32.gmra.mxu0 %v85
    %v186 = vpop.f32.mrf.mxu0
    %v187 = vadd.f32 0.0, %v186
    %v188 = vpop.f32.mrf.mxu0
    %189 = vmatprep.mubr.f32.mxu0 0.0
    %190 = vmatmul.mubr.f32.gmra.mxu0 %v88
    %v191 = vpop.f32.mrf.mxu0
    %v192 = vadd.f32 0.0, %v191
    %v193 = vpop.f32.mrf.mxu0
    %194 = vdwg.mxu0
    %v195 = vld [vmem:[#allocation2] sm:$0xff]
    %v196 = vld [vmem:[#allocation2 + $0x8] sm:$0xff]
    %v197 = vld [vmem:[#allocation2 + $0x10] sm:$0xff]
    %v198 = vld [vmem:[#allocation2 + $0x18] sm:$0xff]
    %v199 = vld [vmem:[#allocation2 + $0x20] sm:$0xff]
    %v200 = vld [vmem:[#allocation2 + $0x28] sm:$0xff]
    %v201 = vld [vmem:[#allocation2 + $0x30] sm:$0xff]
    %v202 = vld [vmem:[#allocation2 + $0x38] sm:$0xff]
    %v203 = vld [vmem:[#allocation2 + $0x40] sm:$0xff]
    %vm204 = vcmask 523264
    %v206 = vsel %vm204, %v195, 0
    %v209 = vsel %vm204, %v196, 0
    %v212 = vsel %vm204, %v197, 0
    %v215 = vsel %vm204, %v198, 0
    %v218 = vsel %vm204, %v199, 0
    %v221 = vsel %vm204, %v200, 0
    %v224 = vsel %vm204, %v201, 0
    %v227 = vsel %vm204, %v202, 0
    %v230 = vsel %vm204, %v203, 0
    %232 = vmatprep.subr.mxu0 0.0
    %233 = vmatpush1.msra.mxu0 0.0
    %234 = vmatprep.subr.mxu0 0.0
    %235 = vmatpush1.msra.mxu0 0.0
    %236 = vmatprep.subr.mxu0 0.0
    %237 = vmatpush1.msra.mxu0 0.0
    %238 = vmatprep.subr.mxu0 0.0
    %239 = vmatpush1.msra.mxu0 0.0
    %240 = vmatprep.subr.mxu0 0.0
    %241 = vmatpush1.msra.mxu0 0.0
    %242 = vmatprep.subr.mxu0 0.0
    %243 = vmatpush1.msra.mxu0 0.0
    %244 = vmatprep.subr.mxu0 0.0
    %245 = vmatpush1.msra.mxu0 0.0
    %246 = vmatprep.subr.mxu0 0.0
    %247 = vmatpush1.msra.mxu0 0.0
    %248 = vmatprep.subr.mxu0 0.0
    %249 = vmatpush1.msra.mxu0 %v192
    %250 = vmatprep.subr.mxu0 0.0
    %251 = vmatpush1.msra.mxu0 %v187
    %252 = vmatprep.subr.mxu0 0.0
    %253 = vmatpush1.msra.mxu0 %v182
    %254 = vmatprep.subr.mxu0 0.0
    %255 = vmatpush1.msra.mxu0 %v177
    %256 = vmatprep.subr.mxu0 0.0
    %257 = vmatpush1.msra.mxu0 %v172
    %258 = vmatprep.subr.mxu0 0.0
    %259 = vmatpush1.msra.mxu0 %v167
    %260 = vmatprep.subr.mxu0 0.0
    %261 = vmatpush1.msra.mxu0 %v162
    %262 = vmatprep.subr.mxu0 0.0
    %263 = vmatpush1.msra.mxu0 %v157
    %264 = vmatprep.subr.mxu0 0.0
    %265 = vmatpush2.msra.mxu0 0.0
    %266 = vmatprep.subr.mxu0 0.0
    %267 = vmatpush2.msra.mxu0 0.0
    %268 = vmatprep.subr.mxu0 0.0
    %269 = vmatpush2.msra.mxu0 0.0
    %270 = vmatprep.subr.mxu0 0.0
    %271 = vmatpush2.msra.mxu0 0.0
    %272 = vmatprep.subr.mxu0 0.0
    %273 = vmatpush2.msra.mxu0 0.0
    %274 = vmatprep.subr.mxu0 0.0
    %275 = vmatpush2.msra.mxu0 0.0
    %276 = vmatprep.subr.mxu0 0.0
    %277 = vmatpush2.msra.mxu0 0.0
    %278 = vmatprep.subr.mxu0 0.0
    %279 = vmatpush2.msra.mxu0 0.0
    %280 = vmatprep.subr.mxu0 0.0
    %281 = vmatpush2.msra.mxu0 0.0
    %282 = vmatprep.subr.mxu0 0.0
    %283 = vmatpush2.msra.mxu0 0.0
    %284 = vmatprep.subr.mxu0 0.0
    %285 = vmatpush2.msra.mxu0 0.0
    %286 = vmatprep.subr.mxu0 0.0
    %287 = vmatpush2.msra.mxu0 0.0
    %288 = vmatprep.subr.mxu0 0.0
    %289 = vmatpush2.msra.mxu0 0.0
    %290 = vmatprep.subr.mxu0 0.0
    %291 = vmatpush2.msra.mxu0 0.0
    %292 = vmatprep.subr.mxu0 0.0
    %293 = vmatpush2.msra.mxu0 0.0
    %294 = vmatprep.subr.mxu0 0.0
    %295 = vmatpush2.msra.mxu0 0.0
    %296 = vmatprep.mubr.f32.mxu0 0.0
    %297 = vmatmul.mubr.f32.gmra.mxu0 %v206
    %v298 = vpop.f32.mrf.mxu0
    %v299 = vadd.f32 0.0, %v298
    %v300 = vpop.f32.mrf.mxu0
    %301 = vmatprep.mubr.f32.mxu0 0.0
    %302 = vmatmul.mubr.f32.gmra.mxu0 %v209
    %v303 = vpop.f32.mrf.mxu0
    %v304 = vadd.f32 0.0, %v303
    %v305 = vpop.f32.mrf.mxu0
    %306 = vmatprep.mubr.f32.mxu0 0.0
    %307 = vmatmul.mubr.f32.gmra.mxu0 %v212
    %v308 = vpop.f32.mrf.mxu0
    %v309 = vadd.f32 0.0, %v308
    %v310 = vpop.f32.mrf.mxu0
    %311 = vmatprep.mubr.f32.mxu0 0.0
    %312 = vmatmul.mubr.f32.gmra.mxu0 %v215
    %v313 = vpop.f32.mrf.mxu0
    %v314 = vadd.f32 0.0, %v313
    %v315 = vpop.f32.mrf.mxu0
    %316 = vmatprep.mubr.f32.mxu0 0.0
    %317 = vmatmul.mubr.f32.gmra.mxu0 %v218
    %v318 = vpop.f32.mrf.mxu0
    %v319 = vadd.f32 0.0, %v318
    %v320 = vpop.f32.mrf.mxu0
    %321 = vmatprep.mubr.f32.mxu0 0.0
    %322 = vmatmul.mubr.f32.gmra.mxu0 %v221
    %v323 = vpop.f32.mrf.mxu0
    %v324 = vadd.f32 0.0, %v323
    %v325 = vpop.f32.mrf.mxu0
    %326 = vmatprep.mubr.f32.mxu0 0.0
    %327 = vmatmul.mubr.f32.gmra.mxu0 %v224
    %v328 = vpop.f32.mrf.mxu0
    %v329 = vadd.f32 0.0, %v328
    %v330 = vpop.f32.mrf.mxu0
    %331 = vmatprep.mubr.f32.mxu0 0.0
    %332 = vmatmul.mubr.f32.gmra.mxu0 %v227
    %v333 = vpop.f32.mrf.mxu0
    %v334 = vadd.f32 0.0, %v333
    %v335 = vpop.f32.mrf.mxu0
    %336 = vmatprep.mubr.f32.mxu0 0.0
    %337 = vmatmul.mubr.f32.gmra.mxu0 %v230
    %v338 = vpop.f32.mrf.mxu0
    %v339 = vadd.f32 0.0, %v338
    %v340 = vpop.f32.mrf.mxu0
    %341 = vdwg.mxu0
    %vm342 = vcmask 146432
    %343 = vst.msk [vmem:[%s3] sm:$0xff] %vm342, %v299
    %344 = vst.msk [vmem:[%s3 + $0x8] sm:$0xff] %vm342, %v304
    %345 = vst.msk [vmem:[%s3 + $0x10] sm:$0xff] %vm342, %v309
    %346 = vst.msk [vmem:[%s3 + $0x18] sm:$0xff] %vm342, %v314
    %347 = vst.msk [vmem:[%s3 + $0x20] sm:$0xff] %vm342, %v319
    %348 = vst.msk [vmem:[%s3 + $0x28] sm:$0xff] %vm342, %v324
    %349 = vst.msk [vmem:[%s3 + $0x30] sm:$0xff] %vm342, %v329
    %350 = vst.msk [vmem:[%s3 + $0x38] sm:$0xff] %vm342, %v334
    %351 = vst.msk [vmem:[%s3 + $0x40] sm:$0xff] %vm342, %v339
    // Predicated region
    $region26: #{scale_change.1} parent=1 // pred_check
      _
    $region27: #{scale_change.1} parent=1 // pred_check_branch
      %353 = sbr.rel (0) target = $region29
    $region28: #{scale_change.1} parent=1 // pred_region
      _
    $region29: #{scale_change.1} parent=1 // pred_fallthru
      _
    // Predicated region
    $region30: #{scale_change.1} parent=1 // pred_check
      _
    $region31: #{scale_change.1} parent=1 // pred_check_branch
      %355 = sbr.rel (0) target = $region33
    $region32: #{scale_change.1} parent=1 // pred_region
      _
    $region33: #{scale_change.1} parent=1 // pred_fallthru
      _
    %356 = vsyncpa [#allocation3], 1
    %357 = vsyncpa [#allocation5], 1

</llo_original>
